<compile_context>
chip_gen: v5e
topology: v5e:2x2
jax: 0.10.0
libtpu: 0.0.40
codegen_flags: <defaults>
</compile_context>

<pallas_src>
import jax
import jax.numpy as jnp
from jax.experimental import pallas as pl
from jax.experimental.pallas import tpu as pltpu


def _to_weights_dtype_kernel(x_ref, w1_ref, b1_ref, w2_ref, b2_ref, o_ref):
    # In-kernel bf16 cast of the activations (VPU op, hidden under MXU/DMA slack).
    x = x_ref[...].astype(w1_ref.dtype)
    # Linear 1: bf16 x bf16 -> f32 accumulate on the MXU.
    h = jnp.dot(x, w1_ref[...], preferred_element_type=jnp.float32)
    h = h + b1_ref[...]                      # f32 bias add
    h = h * jax.nn.sigmoid(h)                # f32 SiLU (EUP sigmoid, VPU mul)
    # Linear 2 (possibly only an N-slice of W2): cast LHS to bf16 for the MXU.
    y = jnp.dot(h.astype(w2_ref.dtype), w2_ref[...],
                preferred_element_type=jnp.float32)
    y = y + b2_ref[...]                      # f32 bias add
    # .to(self.dtype) — the ToWeightsDType cast
    o_ref[...] = y.astype(o_ref.dtype)


def prepare_params(w1, b1, w2, b2, compute_dtype=jnp.bfloat16):
    """One-time (init) parameter prep: transpose to row-major matmul layout and cast
    weights to the MXU compute dtype.  Do NOT call this per forward pass.

    w1: [H, C_in], b1: [H], w2: [H, H], b2: [H]  (PyTorch nn.Linear layout).
    """
    w1_t = jnp.asarray(w1).T.astype(compute_dtype)            # [C_in, H] bf16
    w2_t = jnp.asarray(w2).T.astype(compute_dtype)            # [H, H]   bf16
    b1_r = jnp.asarray(b1, jnp.float32).reshape(1, -1)         # [1, H]   f32
    b2_r = jnp.asarray(b2, jnp.float32).reshape(1, -1)         # [1, H]   f32
    return w1_t, b1_r, w2_t, b2_r


def _num_tensorcores_per_chip():
    # v7x exposes 2 TensorCores per chip; v5e / v6e have 1.
    try:
        kind = jax.devices()[0].device_kind.lower()
    except Exception:
        return 1
    return 2 if "v7" in kind else 1


def _choose_tiling(B, H, num_tc):
    """Returns (tb, n_split).  tb = batch tile rows, n_split = N-split of Linear2."""
    if num_tc <= 1:
        # Single TC: one big block; grid overhead >> HBM traffic for this op.
        return (B if B <= 2048 else 2048), 1
    # 2 TCs (v7x): make the "parallel" axis have >= 2 steps.
    if B >= 32:
        tb = -(-B // 2)             # ceil(B / 2)
        tb = -(-tb // 16) * 16      # round up to a multiple of 16
        return tb, 1
    # Batch too small to split usefully: split the H/N dim of Linear2 instead
    # (requires each half to stay lane-aligned, i.e. H % 256 == 0).
    if H % 256 == 0:
        return B, 2
    return B, 1


def to_weights_dtype_forward(x, params, out_dtype=jnp.bfloat16):
    """x: [B, C_in] (f32); params from prepare_params(). Returns [B, H] in out_dtype."""
    w1_t, b1_r, w2_t, b2_r = params
    B, C_in = x.shape
    H = w1_t.shape[1]

    num_tc = _num_tensorcores_per_chip()
    tb, n_split = _choose_tiling(B, H, num_tc)

    # Pad the batch up to a tile multiple so the pipeline / dual-TC split survives
    # awkward B; padded rows are sliced off after the call.
    B_pad = pl.cdiv(B, tb) * tb
    x_in = x if B_pad == B else jnp.pad(x, ((0, B_pad - B), (0, 0)))

    Hn = H // n_split
    grid = (B_pad // tb, n_split)

    itemsize = lambda a: a.size * a.dtype.itemsize
    cost = pl.CostEstimate(
        flops=2 * B_pad * H * (C_in + H) + 2 * B_pad * H * C_in * (n_split - 1),
        transcendentals=B_pad * H * n_split,          # sigmoid (recomputed per N-slice)
        bytes_accessed=(itemsize(x_in) + itemsize(w1_t) + itemsize(b1_r)
                        + itemsize(w2_t) + itemsize(b2_r)
                        + B_pad * H * jnp.dtype(out_dtype).itemsize),
    )

    out = pl.pallas_call(
        _to_weights_dtype_kernel,
        out_shape=jax.ShapeDtypeStruct((B_pad, H), out_dtype),
        grid=grid,
        in_specs=[
            pl.BlockSpec((tb, C_in), lambda i, j: (i, 0)),   # x tile (f32, cast in-kernel)
            pl.BlockSpec((C_in, H), lambda i, j: (0, 0)),    # W1^T, VMEM-resident
            pl.BlockSpec((1, H), lambda i, j: (0, 0)),       # b1
            pl.BlockSpec((H, Hn), lambda i, j: (0, j)),      # W2^T (full or N-halved)
            pl.BlockSpec((1, Hn), lambda i, j: (0, j)),      # b2
        ],
        out_specs=pl.BlockSpec((tb, Hn), lambda i, j: (i, j)),
        compiler_params=pltpu.CompilerParams(
            dimension_semantics=("parallel", "parallel")),
        cost_estimate=cost,
    )(x_in, w1_t, b1_r, w2_t, b2_r)

    return out if B_pad == B else out[:B]


def _ref_forward(x, w1, b1, w2, b2, out_dtype=jnp.bfloat16):
    # Pure-JAX reference in f32 (PyTorch semantics).
    h = x @ w1.T + b1
    h = h * jax.nn.sigmoid(h)
    y = h @ w2.T + b2
    return y.astype(out_dtype)


if __name__ == "__main__":
    # Shapes consistent with the wrapped TimestepEmbedding(16, H).
    C_in, H = 16, 256

    key = jax.random.PRNGKey(0)
    kx_small, kx_big, k1, k2, k3, k4 = jax.random.split(key, 6)

    # Deterministic PyTorch-Linear-style init: U(-1/sqrt(fan_in), 1/sqrt(fan_in))
    bound1 = 1.0 / (C_in ** 0.5)
    bound2 = 1.0 / (H ** 0.5)
    w1 = jax.random.uniform(k1, (H, C_in), jnp.float32, -bound1, bound1)
    b1 = jax.random.uniform(k2, (H,), jnp.float32, -bound1, bound1)
    w2 = jax.random.uniform(k3, (H, H), jnp.float32, -bound2, bound2)
    b2 = jax.random.uniform(k4, (H,), jnp.float32, -bound2, bound2)

    # One-time param prep (init), then the hot-path forward.
    params = prepare_params(w1, b1, w2, b2, compute_dtype=jnp.bfloat16)

    # Small batch (typical timestep-embedding case; on v7x exercises the N-split path)
    # and a larger non-tile-divisible batch (exercises the padding / batch-tiled path).
    for B, kk in ((8, kx_small), (500, kx_big)):
        x = jax.random.normal(kk, (B, C_in), jnp.float32)
        out = jax.block_until_ready(to_weights_dtype_forward(x, params))
        ref = _ref_forward(x, w1, b1, w2, b2, out_dtype=jnp.bfloat16)
        assert out.shape == (B, H) and out.dtype == jnp.bfloat16
        # bf16 matmul operands (+ bf16 output) => ~1e-2-level deviation from the f32 ref.
        assert jnp.allclose(out.astype(jnp.float32), ref.astype(jnp.float32),
                            atol=5e-2, rtol=5e-2)

    print("KERNEL_OK")
</pallas_src>

<mosaic_0001>
module attributes {stable_mosaic.version = 11 : i64} {
  func.func @_to_weights_dtype_kernel(%arg0: i32, %arg1: i32, %arg2: memref<8x16xf32, #tpu.memory_space<vmem>>, %arg3: memref<16x256xbf16, #tpu.memory_space<vmem>>, %arg4: memref<1x256xf32, #tpu.memory_space<vmem>>, %arg5: memref<256x256xbf16, #tpu.memory_space<vmem>>, %arg6: memref<1x256xf32, #tpu.memory_space<vmem>>, %arg7: memref<8x256xbf16, #tpu.memory_space<vmem>>) attributes {dimension_semantics = [#tpu.dimension_semantics<parallel>, #tpu.dimension_semantics<parallel>], iteration_bounds = array<i64: 1, 1>, scalar_prefetch = 0 : i64, scratch_operands = 0 : i64, tpu.core_type = #tpu.core_type<tc>, window_params = [{transform_indices = @transform_0, window_bounds = array<i64: 8, 16>}, {pipeline_mode = #tpu.pipeline_mode<synchronous>, transform_indices = @transform_1, window_bounds = array<i64: 16, 256>}, {pipeline_mode = #tpu.pipeline_mode<synchronous>, transform_indices = @transform_2, window_bounds = array<i64: 1, 256>}, {transform_indices = @transform_3, window_bounds = array<i64: 256, 256>}, {transform_indices = @transform_4, window_bounds = array<i64: 1, 256>}, {transform_indices = @transform_5, window_bounds = array<i64: 8, 256>}]} {
    %c0 = arith.constant 0 : index
    %c0_0 = arith.constant 0 : index
    %0 = vector.load %arg2[%c0, %c0_0] : memref<8x16xf32, #tpu.memory_space<vmem>>, vector<8x16xf32>
    %1 = arith.truncf %0 : vector<8x16xf32> to vector<8x16xbf16>
    %c0_1 = arith.constant 0 : index
    %c0_2 = arith.constant 0 : index
    %2 = vector.load %arg3[%c0_1, %c0_2] : memref<16x256xbf16, #tpu.memory_space<vmem>>, vector<16x256xbf16>
    %cst = arith.constant dense<0.000000e+00> : vector<8x256xf32>
    %3 = tpu.matmul %1, %2, %cst {dimension_numbers = #tpu.dot_dimension_numbers<[1], [0], [0], [1], [0, 0, 1, 1], [], []>} : vector<8x16xbf16>, vector<16x256xbf16>, vector<8x256xf32> -> vector<8x256xf32>
    %c0_3 = arith.constant 0 : index
    %c0_4 = arith.constant 0 : index
    %4 = vector.load %arg4[%c0_3, %c0_4] : memref<1x256xf32, #tpu.memory_space<vmem>>, vector<1x256xf32>
    %5 = vector.broadcast %4 : vector<1x256xf32> to vector<8x256xf32>
    %6 = arith.addf %3, %5 : vector<8x256xf32>
    %7 = arith.negf %6 : vector<8x256xf32>
    %8 = math.exp %7 : vector<8x256xf32>
    %cst_5 = arith.constant 1.000000e+00 : f32
    %9 = vector.broadcast %cst_5 : f32 to vector<8x256xf32>
    %10 = arith.addf %9, %8 : vector<8x256xf32>
    %11 = arith.divf %9, %10 : vector<8x256xf32>
    %12 = arith.mulf %6, %11 : vector<8x256xf32>
    %13 = arith.truncf %12 : vector<8x256xf32> to vector<8x256xbf16>
    %c0_6 = arith.constant 0 : index
    %c0_7 = arith.constant 0 : index
    %14 = vector.load %arg5[%c0_6, %c0_7] : memref<256x256xbf16, #tpu.memory_space<vmem>>, vector<256x256xbf16>
    %cst_8 = arith.constant dense<0.000000e+00> : vector<8x256xf32>
    %15 = tpu.matmul %13, %14, %cst_8 {dimension_numbers = #tpu.dot_dimension_numbers<[1], [0], [0], [1], [0, 0, 1, 1], [], []>} : vector<8x256xbf16>, vector<256x256xbf16>, vector<8x256xf32> -> vector<8x256xf32>
    %c0_9 = arith.constant 0 : index
    %c0_10 = arith.constant 0 : index
    %16 = vector.load %arg6[%c0_9, %c0_10] : memref<1x256xf32, #tpu.memory_space<vmem>>, vector<1x256xf32>
    %17 = vector.broadcast %16 : vector<1x256xf32> to vector<8x256xf32>
    %18 = arith.addf %15, %17 : vector<8x256xf32>
    %19 = arith.truncf %18 : vector<8x256xf32> to vector<8x256xbf16>
    %c0_11 = arith.constant 0 : index
    %c0_12 = arith.constant 0 : index
    %20 = vector.load %arg7[%c0_11, %c0_12] : memref<8x256xbf16, #tpu.memory_space<vmem>>, vector<8x256xbf16>
    tpu.vector_store %arg7[%c0_11, %c0_12], %19 {strides = array<i32>} : memref<8x256xbf16, #tpu.memory_space<vmem>>, vector<8x256xbf16>,
    return
  }
  func.func @transform_0(%arg0: i32, %arg1: i32) -> (i32, i32) {
    %c0_i32 = arith.constant 0 : i32
    %c0_i32_0 = arith.constant 0 : i32
    return %arg0, %c0_i32 : i32, i32
  }
  func.func @transform_1(%arg0: i32, %arg1: i32) -> (i32, i32) {
    %c0_i32 = arith.constant 0 : i32
    %c0_i32_0 = arith.constant 0 : i32
    %c0_i32_1 = arith.constant 0 : i32
    return %c0_i32, %c0_i32_0 : i32, i32
  }
  func.func @transform_2(%arg0: i32, %arg1: i32) -> (i32, i32) {
    %c0_i32 = arith.constant 0 : i32
    %c0_i32_0 = arith.constant 0 : i32
    %c0_i32_1 = arith.constant 0 : i32
    return %c0_i32, %c0_i32_0 : i32, i32
  }
  func.func @transform_3(%arg0: i32, %arg1: i32) -> (i32, i32) {
    %c0_i32 = arith.constant 0 : i32
    %c0_i32_0 = arith.constant 0 : i32
    return %c0_i32, %arg1 : i32, i32
  }
  func.func @transform_4(%arg0: i32, %arg1: i32) -> (i32, i32) {
    %c0_i32 = arith.constant 0 : i32
    %c0_i32_0 = arith.constant 0 : i32
    return %c0_i32, %arg1 : i32, i32
  }
  func.func @transform_5(%arg0: i32, %arg1: i32) -> (i32, i32) {
    %c0_i32 = arith.constant 0 : i32
    return %arg0, %arg1 : i32, i32
  }
}

</mosaic_0001>

<llo_original>
// kernel: tpu_custom_call.1
$region0: #{tpu_custom_call.1}
  #allocation0 [shape = 'u32[]', space=smem, size = 0x4, offset = 0x4, fixed_abs, tag = 'smem constant byte address 0x4 - core index']
  #allocation1 [shape = 'u32[72,128]{1,0:T(1,128)}', space=vmem, size = 0x9000, scoped, tag = 'internal scratch']
  %s0 = inlined_call_operand.hbm [shape: f32[8,16], index: 0, kind: input, shape index: {}]
  %s1 = inlined_call_operand.hbm [shape: bf16[16,256], index: 1, kind: input, shape index: {}]
  %s2 = inlined_call_operand.hbm [shape: f32[1,256], index: 2, kind: input, shape index: {}]
  %s3 = inlined_call_operand.hbm [shape: bf16[256,256], index: 3, kind: input, shape index: {}]
  %s4 = inlined_call_operand.vmem [shape: f32[1,256], index: 4, kind: input, shape index: {}]
  %s5 = inlined_call_operand.hbm [shape: bf16[8,256], index: 5, kind: output, shape index: {}]
  %s6 = sld [smem:[#allocation0]]
  $region46: #{tpu_custom_call.1} parent=0
    _
  %s8 = ssub.s32 1, %s6
  %s9 = scalar_select 0, %s8, %s6
  $region1: #{tpu_custom_call.1} parent=0
    #allocation2 [shape = 'u8[4096]{0}', space=vmem, size = 0x1000, scoped, tag = 'input window, operand 0, single buffered']
    #allocation3 [shape = 's32[1]{0}', space=sflag, size = 0x4, scoped, tag = 'scoped memory for tpu_custom_call.1']
    #allocation4 [shape = 's32[1]{0}', space=sflag, size = 0x4, scoped, tag = 'scoped memory for tpu_custom_call.1']
    #allocation5 [shape = 'u8[8192]{0}', space=vmem, size = 0x2000, scoped, tag = 'input window, operand 1, single buffered']
    #allocation6 [shape = 's32[1]{0}', space=sflag, size = 0x4, scoped, tag = 'scoped memory for tpu_custom_call.1']
    #allocation7 [shape = 'u8[1024]{0}', space=vmem, size = 0x400, scoped, tag = 'input window, operand 2, single buffered']
    #allocation8 [shape = 'u8[131072]{0}', space=vmem, size = 0x20000, scoped, tag = 'input window, operand 3, single buffered']
    #allocation9 [shape = 's32[1]{0}', space=sflag, size = 0x4, scoped, tag = 'scoped memory for tpu_custom_call.1']
    #allocation10 [shape = 'u8[4096]{0}', space=vmem, size = 0x1000, scoped, tag = 'output window, operand 0, single buffered']
    %10 = vsyncpa [#allocation3], 0
    %11 = vsyncpa [#allocation6], 0
    %12 = vsyncpa [#allocation9], 0
    %13 = vsyncpa [#allocation4], 0
    // Predicated region
    $region2: #{tpu_custom_call.1} parent=1 // pred_check
      _
    $region3: #{tpu_custom_call.1} parent=1 // pred_check_branch
      %15 = sbr.rel (0) target = $region5
    $region4: #{tpu_custom_call.1} parent=1 // pred_region
      %17 = vsyncadd [#allocation3], 0
      %s19 = sshll.u32 %s0, 4
      %s20 = int_to_ptr.hbm [resolvable:$true] %s19
      %s21 = sshll.u32 [#allocation2], 4
      %s22 = int_to_ptr.vmem [resolvable:$true] %s21
      %24 = dma.hbm_to_vmem [thread:$0]  %s20, 128, %s22, [#allocation3]
    $region5: #{tpu_custom_call.1} parent=1 // pred_fallthru
      _
    // Predicated region
    $region6: #{tpu_custom_call.1} parent=1 // pred_check
      _
    $region7: #{tpu_custom_call.1} parent=1 // pred_check_branch
      %26 = sbr.rel (0) target = $region9
    $region8: #{tpu_custom_call.1} parent=1 // pred_region
      %28 = vsyncadd [#allocation6], 0
      %s29 = sshll.u32 %s1, 4
      %s30 = int_to_ptr.hbm [resolvable:$true] %s29
      %s31 = sshll.u32 [#allocation5], 4
      %s32 = int_to_ptr.vmem [resolvable:$true] %s31
      %37 = dma.hbm_to_vmem [thread:$0]  %s30, 256, %s32, [#allocation6], 128, 128, 8
    $region9: #{tpu_custom_call.1} parent=1 // pred_fallthru
      _
    // Predicated region
    $region10: #{tpu_custom_call.1} parent=1 // pred_check
      _
    $region11: #{tpu_custom_call.1} parent=1 // pred_check_branch
      %39 = sbr.rel (0) target = $region13
    $region12: #{tpu_custom_call.1} parent=1 // pred_region
      %41 = vsyncadd [#allocation6], 0
      %s43 = sshll.u32 %s2, 4
      %s44 = int_to_ptr.hbm [resolvable:$true] %s43
      %s45 = sshll.u32 [#allocation7], 4
      %s46 = int_to_ptr.vmem [resolvable:$true] %s45
      %48 = dma.hbm_to_vmem [thread:$0]  %s44, 32, %s46, [#allocation6]
    $region13: #{tpu_custom_call.1} parent=1 // pred_fallthru
      _
    // Predicated region
    $region14: #{tpu_custom_call.1} parent=1 // pred_check
      _
    $region15: #{tpu_custom_call.1} parent=1 // pred_check_branch
      %50 = sbr.rel (0) target = $region17
    $region16: #{tpu_custom_call.1} parent=1 // pred_region
      %52 = vsyncadd [#allocation9], 0
      %s53 = sshll.u32 %s3, 4
      %s54 = int_to_ptr.hbm [resolvable:$true] %s53
      %s55 = sshll.u32 [#allocation8], 4
      %s56 = int_to_ptr.vmem [resolvable:$true] %s55
      %61 = dma.hbm_to_vmem [thread:$0]  %s54, 4096, %s56, [#allocation9], 128, 128, 8
    $region17: #{tpu_custom_call.1} parent=1 // pred_fallthru
      _
    // Predicated region
    $region18: #{tpu_custom_call.1} parent=1 // pred_check
      _
    $region19: #{tpu_custom_call.1} parent=1 // pred_check_branch
      %63 = sbr.rel (0) target = $region21
    $region20: #{tpu_custom_call.1} parent=1 // pred_region
      _
    $region21: #{tpu_custom_call.1} parent=1 // pred_fallthru
      _
    // Predicated region
    $region22: #{tpu_custom_call.1} parent=1 // pred_check
      _
    $region23: #{tpu_custom_call.1} parent=1 // pred_check_branch
      %65 = sbr.rel (0) target = $region25
    $region24: #{tpu_custom_call.1} parent=1 // pred_region
      %67 = dma.done [#allocation3], 128
    $region25: #{tpu_custom_call.1} parent=1 // pred_fallthru
      _
    // Predicated region
    $region26: #{tpu_custom_call.1} parent=1 // pred_check
      _
    $region27: #{tpu_custom_call.1} parent=1 // pred_check_branch
      %69 = sbr.rel (0) target = $region29
    $region28: #{tpu_custom_call.1} parent=1 // pred_region
      %71 = dma.done [#allocation6], 256
    $region29: #{tpu_custom_call.1} parent=1 // pred_fallthru
      _
    // Predicated region
    $region30: #{tpu_custom_call.1} parent=1 // pred_check
      _
    $region31: #{tpu_custom_call.1} parent=1 // pred_check_branch
      %73 = sbr.rel (0) target = $region33
    $region32: #{tpu_custom_call.1} parent=1 // pred_region
      %75 = dma.done [#allocation6], 32
    $region33: #{tpu_custom_call.1} parent=1 // pred_fallthru
      _
    // Predicated region
    $region34: #{tpu_custom_call.1} parent=1 // pred_check
      _
    $region35: #{tpu_custom_call.1} parent=1 // pred_check_branch
      %77 = sbr.rel (0) target = $region37
    $region36: #{tpu_custom_call.1} parent=1 // pred_region
      %79 = dma.done [#allocation9], 4096
    $region37: #{tpu_custom_call.1} parent=1 // pred_fallthru
      _
    %v81 = vld [vmem:[#allocation2] sm:$0xff]
    %v82 = vpack.c.bf16 %v81, %v81
    %v83 = vld [vmem:[#allocation5] sm:$0xff]
    %v84 = vld [vmem:[#allocation5 + $0x8] sm:$0xff]
    %v85 = vld [vmem:[#allocation7] sm:$0x3]
    %v87 = vperm.slane %v85, 0
    %v88 = vperm.slane %v85, 1
    %v93 = vunpack.c.l.b16 %v83
    %v94 = vunpack.c.h.b16 %v83
    %v95 = vunpack.c.l.b16 %v84
    %v96 = vunpack.c.h.b16 %v84
    %v97 = vpack.c.b16 %v95, %v93
    %v98 = vpack.c.b16 %v96, %v94
    %vm101 = vcmask 130048
    %v103 = vsel %vm101, %v82, 0
    %105 = vmatpush.bf16.msra.mxu0 0
    %106 = vmatpush.bf16.msra.mxu0 0
    %107 = vmatpush.bf16.msra.mxu0 0
    %108 = vmatpush.bf16.msra.mxu0 0
    %109 = vmatpush.bf16.msra.mxu0 0
    %110 = vmatpush.bf16.msra.mxu0 0
    %111 = vmatpush.bf16.msra.mxu0 0
    %112 = vmatpush.bf16.msra.mxu0 %v97
    %113 = vmatmul.bf16.gmra.mxu0 %v103
    %v114 = vpop.f32.mrf.mxu0
    %v115 = vadd.f32 %v87, %v114
    %v116 = vpop.f32.mrf.mxu0
    %117 = vdwg.mxu0
    %118 = vmatpush.bf16.msra.mxu0 0
    %119 = vmatpush.bf16.msra.mxu0 0
    %120 = vmatpush.bf16.msra.mxu0 0
    %121 = vmatpush.bf16.msra.mxu0 0
    %122 = vmatpush.bf16.msra.mxu0 0
    %123 = vmatpush.bf16.msra.mxu0 0
    %124 = vmatpush.bf16.msra.mxu0 0
    %125 = vmatpush.bf16.msra.mxu0 %v98
    %126 = vmatmul.bf16.gmra.mxu0 %v103
    %v127 = vpop.f32.mrf.mxu0
    %v128 = vadd.f32 %v88, %v127
    %v129 = vpop.f32.mrf.mxu0
    %130 = vdwg.mxu0
    %v131 = vxor.u32 %v115, 2147483648
    %v132 = vxor.u32 %v128, 2147483648
    %v133 = vmul.f32 %v131, 1.442695
    %v134 = vpow.pop %v133
    %v135 = vmul.f32 %v132, 1.442695
    %v136 = vpow.pop %v135
    %v137 = vadd.f32 %v134, 1.0
    %v138 = vadd.f32 %v136, 1.0
    %v139 = vrcp.pop %v137
    %v140 = vmul.f32 %v137, %v139
    %v141 = vsub.f32 1.0, %v140
    %v142 = vmul.f32 %v139, %v141
    %v143 = vadd.f32 %v139, %v142
    %vm144 = vweird.f32 %v137
    %vm145 = vweird.f32 %v139
    %vm146 = vmor %vm144, %vm145
    %v147 = vsel %vm146, %v139, %v143
    %v148 = vand.u32 2147483647, %v137
    %vm149 = vcmp.eq.f32.partialorder %v148, 8.507059e+37
    %v150 = vand.u32 %v137, 2147483648
    %v151 = vor.u32 1.1754944e-38, %v150
    %v152 = vsel %vm149, %v151, %v147
    %v153 = vmul.f32 1.0, %v152
    %v154 = vrcp.pop %v138
    %v155 = vmul.f32 %v138, %v154
    %v156 = vsub.f32 1.0, %v155
    %v157 = vmul.f32 %v154, %v156
    %v158 = vadd.f32 %v154, %v157
    %vm159 = vweird.f32 %v138
    %vm160 = vweird.f32 %v154
    %vm161 = vmor %vm159, %vm160
    %v162 = vsel %vm161, %v154, %v158
    %v163 = vand.u32 2147483647, %v138
    %vm164 = vcmp.eq.f32.partialorder %v163, 8.507059e+37
    %v165 = vand.u32 %v138, 2147483648
    %v166 = vor.u32 1.1754944e-38, %v165
    %v167 = vsel %vm164, %v166, %v162
    %v168 = vmul.f32 1.0, %v167
    %v169 = vmul.f32 %v115, %v153
    %v170 = vmul.f32 %v128, %v168
    %v171 = vpack.c.bf16 %v169, %v169
    %v172 = vpack.c.bf16 %v170, %v170
    %v173 = vld [vmem:[#allocation8] sm:$0xff]
    %v174 = vld [vmem:[#allocation8 + $0x8] sm:$0xff]
    %v175 = vld [vmem:[#allocation8 + $0x10] sm:$0xff]
    %v176 = vld [vmem:[#allocation8 + $0x18] sm:$0xff]
    %v177 = vld [vmem:[#allocation8 + $0x20] sm:$0xff]
    %v178 = vld [vmem:[#allocation8 + $0x28] sm:$0xff]
    %v179 = vld [vmem:[#allocation8 + $0x30] sm:$0xff]
    %v180 = vld [vmem:[#allocation8 + $0x38] sm:$0xff]
    %v181 = vld [vmem:[#allocation8 + $0x40] sm:$0xff]
    %v182 = vld [vmem:[#allocation8 + $0x48] sm:$0xff]
    %v183 = vld [vmem:[#allocation8 + $0x50] sm:$0xff]
    %v184 = vld [vmem:[#allocation8 + $0x58] sm:$0xff]
    %v185 = vld [vmem:[#allocation8 + $0x60] sm:$0xff]
    %v186 = vld [vmem:[#allocation8 + $0x68] sm:$0xff]
    %v187 = vld [vmem:[#allocation8 + $0x70] sm:$0xff]
    %v188 = vld [vmem:[#allocation8 + $0x78] sm:$0xff]
    %v189 = vld [vmem:[#allocation8 + $0x80] sm:$0xff]
    %v190 = vld [vmem:[#allocation8 + $0x88] sm:$0xff]
    %v191 = vld [vmem:[#allocation8 + $0x90] sm:$0xff]
    %v192 = vld [vmem:[#allocation8 + $0x98] sm:$0xff]
    %v193 = vld [vmem:[#allocation8 + $0xa0] sm:$0xff]
    %v194 = vld [vmem:[#allocation8 + $0xa8] sm:$0xff]
    %v195 = vld [vmem:[#allocation8 + $0xb0] sm:$0xff]
    %v196 = vld [vmem:[#allocation8 + $0xb8] sm:$0xff]
    %v197 = vld [vmem:[#allocation8 + $0xc0] sm:$0xff]
    %v198 = vld [vmem:[#allocation8 + $0xc8] sm:$0xff]
    %v199 = vld [vmem:[#allocation8 + $0xd0] sm:$0xff]
    %v200 = vld [vmem:[#allocation8 + $0xd8] sm:$0xff]
    %v201 = vld [vmem:[#allocation8 + $0xe0] sm:$0xff]
    %v202 = vld [vmem:[#allocation8 + $0xe8] sm:$0xff]
    %v203 = vld [vmem:[#allocation8 + $0xf0] sm:$0xff]
    %v204 = vld [vmem:[#allocation8 + $0xf8] sm:$0xff]
    %v205 = vld [vmem:[%s4] sm:$0x3]
    %v207 = vperm.slane %v205, 0
    %v208 = vperm.slane %v205, 1
    %v243 = vunpack.c.l.b16 %v173
    %v244 = vunpack.c.h.b16 %v173
    %v245 = vunpack.c.l.b16 %v174
    %v246 = vunpack.c.h.b16 %v174
    %v247 = vunpack.c.l.b16 %v175
    %v248 = vunpack.c.h.b16 %v175
    %v249 = vunpack.c.l.b16 %v176
    %v250 = vunpack.c.h.b16 %v176
    %v251 = vunpack.c.l.b16 %v177
    %v252 = vunpack.c.h.b16 %v177
    %v253 = vunpack.c.l.b16 %v178
    %v254 = vunpack.c.h.b16 %v178
    %v255 = vunpack.c.l.b16 %v179
    %v256 = vunpack.c.h.b16 %v179
    %v257 = vunpack.c.l.b16 %v180
    %v258 = vunpack.c.h.b16 %v180
    %v259 = vunpack.c.l.b16 %v181
    %v260 = vunpack.c.h.b16 %v181
    %v261 = vunpack.c.l.b16 %v182
    %v262 = vunpack.c.h.b16 %v182
    %v263 = vunpack.c.l.b16 %v183
    %v264 = vunpack.c.h.b16 %v183
    %v265 = vunpack.c.l.b16 %v184
    %v266 = vunpack.c.h.b16 %v184
    %v267 = vunpack.c.l.b16 %v185
    %v268 = vunpack.c.h.b16 %v185
    %v269 = vunpack.c.l.b16 %v186
    %v270 = vunpack.c.h.b16 %v186
    %v271 = vunpack.c.l.b16 %v187
    %v272 = vunpack.c.h.b16 %v187
    %v273 = vunpack.c.l.b16 %v188
    %v274 = vunpack.c.h.b16 %v188
    %v275 = vunpack.c.l.b16 %v189
    %v276 = vunpack.c.h.b16 %v189
    %v277 = vunpack.c.l.b16 %v190
    %v278 = vunpack.c.h.b16 %v190
    %v279 = vunpack.c.l.b16 %v191
    %v280 = vunpack.c.h.b16 %v191
    %v281 = vunpack.c.l.b16 %v192
    %v282 = vunpack.c.h.b16 %v192
    %v283 = vunpack.c.l.b16 %v193
    %v284 = vunpack.c.h.b16 %v193
    %v285 = vunpack.c.l.b16 %v194
    %v286 = vunpack.c.h.b16 %v194
    %v287 = vunpack.c.l.b16 %v195
    %v288 = vunpack.c.h.b16 %v195
    %v289 = vunpack.c.l.b16 %v196
    %v290 = vunpack.c.h.b16 %v196
    %v291 = vunpack.c.l.b16 %v197
    %v292 = vunpack.c.h.b16 %v197
    %v293 = vunpack.c.l.b16 %v198
    %v294 = vunpack.c.h.b16 %v198
    %v295 = vunpack.c.l.b16 %v199
    %v296 = vunpack.c.h.b16 %v199
    %v297 = vunpack.c.l.b16 %v200
    %v298 = vunpack.c.h.b16 %v200
    %v299 = vunpack.c.l.b16 %v201
    %v300 = vunpack.c.h.b16 %v201
    %v301 = vunpack.c.l.b16 %v202
    %v302 = vunpack.c.h.b16 %v202
    %v303 = vunpack.c.l.b16 %v203
    %v304 = vunpack.c.h.b16 %v203
    %v305 = vunpack.c.l.b16 %v204
    %v306 = vunpack.c.h.b16 %v204
    %v307 = vpack.c.b16 %v245, %v243
    %v308 = vpack.c.b16 %v246, %v244
    %v309 = vpack.c.b16 %v249, %v247
    %v310 = vpack.c.b16 %v250, %v248
    %v311 = vpack.c.b16 %v253, %v251
    %v312 = vpack.c.b16 %v254, %v252
    %v313 = vpack.c.b16 %v257, %v255
    %v314 = vpack.c.b16 %v258, %v256
    %v315 = vpack.c.b16 %v261, %v259
    %v316 = vpack.c.b16 %v262, %v260
    %v317 = vpack.c.b16 %v265, %v263
    %v318 = vpack.c.b16 %v266, %v264
    %v319 = vpack.c.b16 %v269, %v267
    %v320 = vpack.c.b16 %v270, %v268
    %v321 = vpack.c.b16 %v273, %v271
    %v322 = vpack.c.b16 %v274, %v272
    %v323 = vpack.c.b16 %v277, %v275
    %v324 = vpack.c.b16 %v278, %v276
    %v325 = vpack.c.b16 %v281, %v279
    %v326 = vpack.c.b16 %v282, %v280
    %v327 = vpack.c.b16 %v285, %v283
    %v328 = vpack.c.b16 %v286, %v284
    %v329 = vpack.c.b16 %v289, %v287
    %v330 = vpack.c.b16 %v290, %v288
    %v331 = vpack.c.b16 %v293, %v291
    %v332 = vpack.c.b16 %v294, %v292
    %v333 = vpack.c.b16 %v297, %v295
    %v334 = vpack.c.b16 %v298, %v296
    %v335 = vpack.c.b16 %v301, %v299
    %v336 = vpack.c.b16 %v302, %v300
    %v337 = vpack.c.b16 %v305, %v303
    %v338 = vpack.c.b16 %v306, %v304
    %371 = vmatpush.bf16.msra.mxu0 %v321
    %372 = vmatpush.bf16.msra.mxu0 %v319
    %373 = vmatpush.bf16.msra.mxu0 %v317
    %374 = vmatpush.bf16.msra.mxu0 %v315
    %375 = vmatpush.bf16.msra.mxu0 %v313
    %376 = vmatpush.bf16.msra.mxu0 %v311
    %377 = vmatpush.bf16.msra.mxu0 %v309
    %378 = vmatpush.bf16.msra.mxu0 %v307
    %379 = vmatmul.bf16.gmra.mxu0 %v171
    %v380 = vpop.f32.mrf.mxu0
    %v381 = vadd.f32 %v207, %v380
    %v382 = vpop.f32.mrf.mxu0
    %383 = vdwg.mxu0
    %384 = vmatpush.bf16.msra.mxu0 %v337
    %385 = vmatpush.bf16.msra.mxu0 %v335
    %386 = vmatpush.bf16.msra.mxu0 %v333
    %387 = vmatpush.bf16.msra.mxu0 %v331
    %388 = vmatpush.bf16.msra.mxu0 %v329
    %389 = vmatpush.bf16.msra.mxu0 %v327
    %390 = vmatpush.bf16.msra.mxu0 %v325
    %391 = vmatpush.bf16.msra.mxu0 %v323
    %392 = vmatmul.bf16.gmra.mxu0 %v172
    %v393 = vpop.f32.mrf.mxu0
    %v394 = vadd.f32 %v381, %v393
    %v395 = vpop.f32.mrf.mxu0
    %396 = vdwg.mxu0
    %397 = vmatpush.bf16.msra.mxu0 %v322
    %398 = vmatpush.bf16.msra.mxu0 %v320
    %399 = vmatpush.bf16.msra.mxu0 %v318
    %400 = vmatpush.bf16.msra.mxu0 %v316
    %401 = vmatpush.bf16.msra.mxu0 %v314
    %402 = vmatpush.bf16.msra.mxu0 %v312
    %403 = vmatpush.bf16.msra.mxu0 %v310
    %404 = vmatpush.bf16.msra.mxu0 %v308
    %405 = vmatmul.bf16.gmra.mxu0 %v171
    %v406 = vpop.f32.mrf.mxu0
    %v407 = vadd.f32 %v208, %v406
    %v408 = vpop.f32.mrf.mxu0
    %409 = vdwg.mxu0
    %410 = vmatpush.bf16.msra.mxu0 %v338
    %411 = vmatpush.bf16.msra.mxu0 %v336
    %412 = vmatpush.bf16.msra.mxu0 %v334
    %413 = vmatpush.bf16.msra.mxu0 %v332
    %414 = vmatpush.bf16.msra.mxu0 %v330
    %415 = vmatpush.bf16.msra.mxu0 %v328
    %416 = vmatpush.bf16.msra.mxu0 %v326
    %417 = vmatpush.bf16.msra.mxu0 %v324
    %418 = vmatmul.bf16.gmra.mxu0 %v172
    %v419 = vpop.f32.mrf.mxu0
    %v420 = vadd.f32 %v407, %v419
    %v421 = vpop.f32.mrf.mxu0
    %422 = vdwg.mxu0
    %v423 = vpack.c.bf16 %v420, %v394
    %424 = vst [vmem:[#allocation10] sm:$0xff] %v423
    // Predicated region
    $region38: #{tpu_custom_call.1} parent=1 // pred_check
      _
    $region39: #{tpu_custom_call.1} parent=1 // pred_check_branch
      %426 = sbr.rel (0) target = $region41
    $region40: #{tpu_custom_call.1} parent=1 // pred_region
      %428 = vsyncadd [#allocation4], 0
      %s430 = sshll.u32 [#allocation10], 4
      %s431 = int_to_ptr.vmem [resolvable:$true] %s430
      %s432 = sshll.u32 %s5, 4
      %s433 = int_to_ptr.hbm [resolvable:$true] %s432
      %435 = dma.vmem_to_hbm [thread:$0]  %s431, 128, %s433, [#allocation4]
    $region41: #{tpu_custom_call.1} parent=1 // pred_fallthru
      _
    // Predicated region
    $region42: #{tpu_custom_call.1} parent=1 // pred_check
      _
    $region43: #{tpu_custom_call.1} parent=1 // pred_check_branch
      %437 = sbr.rel (0) target = $region45
    $region44: #{tpu_custom_call.1} parent=1 // pred_region
      %439 = dma.done [#allocation4], 128
    $region45: #{tpu_custom_call.1} parent=1 // pred_fallthru
      _
    %440 = vsyncpa [#allocation3], 1
    %441 = vsyncpa [#allocation6], 1
    %442 = vsyncpa [#allocation9], 1
    %443 = vsyncpa [#allocation4], 1

</llo_original>
